<compile_context>
chip_gen: v6e
topology: v6e:2x2x1
jax: 0.10.0
libtpu: 0.0.40
codegen_flags: <defaults>
</compile_context>

<pallas_src>
import functools

import jax
import jax.numpy as jnp
from jax.experimental import pallas as pl
from jax.experimental.pallas import tpu as pltpu


def _f_combined_kernel(x_ref, zc_ref, w1_ref, w2_ref, b2_ref, w3_ref, b3_ref,
                       o_ref):
    # x_ref : (1, C, TN) tile of pixels (channels on sublanes, pixels on lanes)
    # zc_ref: (1, C, 1)  per-batch  (w1_z @ z_b + b1)  column vector
    x = x_ref[0].astype(jnp.float32)                         # (C, TN)
    zc = zc_ref[0].astype(jnp.float32)                       # (C, 1)

    # layer 1: 1x1 conv (C+z_dim -> C) + ReLU.  Feature part via MXU, z part is
    # the per-batch constant column zc (already includes bias 1).
    h1 = jnp.dot(w1_ref[...].astype(jnp.float32), x,
                 preferred_element_type=jnp.float32) + zc    # (C, TN)
    h1 = jnp.maximum(h1, 0.0)

    # layer 2: 1x1 conv (C -> C) + ReLU
    h2 = jnp.dot(w2_ref[...].astype(jnp.float32), h1,
                 preferred_element_type=jnp.float32) + b2_ref[...].astype(jnp.float32)
    h2 = jnp.maximum(h2, 0.0)

    # last layer: 1x1 conv (C -> num_classes), no activation.  Output tile is
    # (num_classes, TN): lane-dense stores.
    out = jnp.dot(w3_ref[...].astype(jnp.float32), h2,
                  preferred_element_type=jnp.float32) + b3_ref[...].astype(jnp.float32)
    o_ref[0] = out.astype(o_ref.dtype)


def _pick_lane_tile(hw, target):
    """Largest lane tile <= target that is a multiple of 128 and divides hw
    (falls back to the full spatial extent, which is always a legal block)."""
    target = min(target, hw)
    if target == hw:
        return hw
    t = max(128, (target // 128) * 128)
    while t >= 128:
        if hw % t == 0:
            return t
        t -= 128
    return hw


def f_combined_forward(feature_map, z, params, *, tile_n=2048):
    """feature_map: (B, C, H, W) NCHW, z: (B, z_dim). Returns (B, num_classes, H, W).

    Weights are stored PyTorch-Conv2d-style as (out_channels, in_channels):
      w1: (C, C+z_dim), b1: (C,), w2: (C, C), b2: (C,), w3: (nc, C), b3: (nc,)
    """
    B, C, H, W = feature_map.shape
    z_dim = z.shape[1]
    w1, b1, w2, b2, w3, b3 = params
    num_classes = w3.shape[0]
    HW = H * W

    # ---- tiny wrapper-side glue (no spatial-sized tensors materialized) ----
    # Split layer-1 weight into feature / z parts; fold the z contribution and
    # bias 1 into one per-batch (C, 1) column.
    w1_f = w1[:, :C]                                          # (C, C)
    w1_z = w1[:, C:]                                          # (C, z_dim)
    zc = (z.astype(jnp.float32) @ jnp.transpose(w1_z).astype(jnp.float32)
          + b1.astype(jnp.float32))                           # (B, C)
    zc = zc.reshape(B, C, 1)
    b2c = b2.reshape(C, 1)
    b3c = b3.reshape(num_classes, 1)

    x = feature_map.reshape(B, C, HW)                         # free reshape, NCHW-native

    tn = _pick_lane_tile(HW, tile_n)
    assert HW % tn == 0
    grid = (B, HW // tn)

    out_flat = pl.pallas_call(
        _f_combined_kernel,
        out_shape=jax.ShapeDtypeStruct((B, num_classes, HW), feature_map.dtype),
        grid_spec=pltpu.PrefetchScalarGridSpec(
            num_scalar_prefetch=0,
            grid=grid,
            in_specs=[
                pl.BlockSpec((1, C, tn), lambda b, j: (b, 0, j)),          # x tile
                pl.BlockSpec((1, C, 1), lambda b, j: (b, 0, 0)),           # per-batch z column
                pl.BlockSpec((C, C), lambda b, j: (0, 0)),                 # w1_f
                pl.BlockSpec((C, C), lambda b, j: (0, 0)),                 # w2
                pl.BlockSpec((C, 1), lambda b, j: (0, 0)),                 # b2
                pl.BlockSpec((num_classes, C), lambda b, j: (0, 0)),       # w3
                pl.BlockSpec((num_classes, 1), lambda b, j: (0, 0)),       # b3
            ],
            out_specs=pl.BlockSpec((1, num_classes, tn), lambda b, j: (b, 0, j)),
        ),
        compiler_params=pltpu.CompilerParams(
            dimension_semantics=("parallel", "parallel")),
    )(x, zc, w1_f, w2, b2c, w3, b3c)

    return out_flat.reshape(B, num_classes, H, W)             # free reshape, stays NCHW


def init_params(key, input_channels, num_classes, z_dim, dtype=jnp.float32):
    """Deterministic normal init (mirrors init_weights).  Conv2d-style (out, in)."""
    # TODO(synk): the 'orthogonal' initializer branch of the PyTorch module is not replicated.
    c_in = input_channels + z_dim
    k1, k2, k3, k4, k5, k6 = jax.random.split(key, 6)
    std = 0.1
    w1 = (jax.random.normal(k1, (input_channels, c_in)) * std).astype(dtype)
    b1 = (jax.random.normal(k4, (input_channels,)) * std).astype(dtype)
    w2 = (jax.random.normal(k2, (input_channels, input_channels)) * std).astype(dtype)
    b2 = (jax.random.normal(k5, (input_channels,)) * std).astype(dtype)
    w3 = (jax.random.normal(k3, (num_classes, input_channels)) * std).astype(dtype)
    b3 = (jax.random.normal(k6, (num_classes,)) * std).astype(dtype)
    return (w1, b1, w2, b2, w3, b3)


def _reference_forward(feature_map, z, params):
    """Pure-JAX reference for correctness checking (mirrors the PyTorch forward)."""
    w1, b1, w2, b2, w3, b3 = params
    B, C, H, W = feature_map.shape
    z_dim = z.shape[1]
    fmap = jnp.transpose(feature_map, (0, 2, 3, 1))           # (B, H, W, C)
    zb = jnp.broadcast_to(z[:, None, None, :], (B, H, W, z_dim))
    x = jnp.concatenate([fmap, zb], axis=-1)                  # (B, H, W, C+z_dim)
    h1 = jax.nn.relu(x @ jnp.transpose(w1) + b1)
    h2 = jax.nn.relu(h1 @ jnp.transpose(w2) + b2)
    out = h2 @ jnp.transpose(w3) + b3
    return jnp.transpose(out, (0, 3, 1, 2))                   # (B, num_classes, H, W)


if __name__ == "__main__":
    # Small shapes consistent with the module's forward.
    B, C, H, W = 2, 4, 16, 16
    z_dim = 3
    num_classes = 5

    key = jax.random.PRNGKey(0)
    k_fm, k_z, k_p = jax.random.split(key, 3)
    feature_map = jax.random.normal(k_fm, (B, C, H, W), jnp.float32)
    z = jax.random.normal(k_z, (B, z_dim), jnp.float32)
    params = init_params(k_p, C, num_classes, z_dim)

    fwd = jax.jit(functools.partial(f_combined_forward, tile_n=2048))
    out = jax.block_until_ready(fwd(feature_map, z, params))

    ref = _reference_forward(feature_map, z, params)
    assert out.shape == (B, num_classes, H, W)
    assert jnp.allclose(out, ref, atol=1e-5, rtol=1e-5), float(
        jnp.max(jnp.abs(out - ref)))

    print("KERNEL_OK")
</pallas_src>

<mosaic_0001>
module attributes {stable_mosaic.version = 11 : i64} {
  func.func @_f_combined_kernel(%arg0: i32, %arg1: i32, %arg2: memref<1x4x256xf32, #tpu.memory_space<vmem>>, %arg3: memref<1x4x1xf32, #tpu.memory_space<vmem>>, %arg4: memref<4x4xf32, #tpu.memory_space<vmem>>, %arg5: memref<4x4xf32, #tpu.memory_space<vmem>>, %arg6: memref<4x1xf32, #tpu.memory_space<vmem>>, %arg7: memref<5x4xf32, #tpu.memory_space<vmem>>, %arg8: memref<5x1xf32, #tpu.memory_space<vmem>>, %arg9: memref<1x5x256xf32, #tpu.memory_space<vmem>>) attributes {dimension_semantics = [#tpu.dimension_semantics<parallel>, #tpu.dimension_semantics<parallel>], iteration_bounds = array<i64: 2, 1>, scalar_prefetch = 0 : i64, scratch_operands = 0 : i64, tpu.core_type = #tpu.core_type<tc>, window_params = [{transform_indices = @transform_0, window_bounds = array<i64: 1, 4, 256>}, {transform_indices = @transform_1, window_bounds = array<i64: 1, 4, 1>}, {pipeline_mode = #tpu.pipeline_mode<synchronous>, transform_indices = @transform_2, window_bounds = array<i64: 4, 4>}, {pipeline_mode = #tpu.pipeline_mode<synchronous>, transform_indices = @transform_3, window_bounds = array<i64: 4, 4>}, {pipeline_mode = #tpu.pipeline_mode<synchronous>, transform_indices = @transform_4, window_bounds = array<i64: 4, 1>}, {pipeline_mode = #tpu.pipeline_mode<synchronous>, transform_indices = @transform_5, window_bounds = array<i64: 5, 4>}, {pipeline_mode = #tpu.pipeline_mode<synchronous>, transform_indices = @transform_6, window_bounds = array<i64: 5, 1>}, {transform_indices = @transform_7, window_bounds = array<i64: 1, 5, 256>}]} {
    %c0 = arith.constant 0 : index
    %c0_0 = arith.constant 0 : index
    %c0_1 = arith.constant 0 : index
    %0 = vector.load %arg2[%c0, %c0_0, %c0_1] : memref<1x4x256xf32, #tpu.memory_space<vmem>>, vector<1x4x256xf32>
    %1 = vector.shape_cast %0 : vector<1x4x256xf32> to vector<4x256xf32>
    %c0_2 = arith.constant 0 : index
    %c0_3 = arith.constant 0 : index
    %c0_4 = arith.constant 0 : index
    %2 = vector.load %arg3[%c0_2, %c0_3, %c0_4] : memref<1x4x1xf32, #tpu.memory_space<vmem>>, vector<1x4x1xf32>
    %3 = vector.shape_cast %2 : vector<1x4x1xf32> to vector<4x1xf32>
    %c0_5 = arith.constant 0 : index
    %c0_6 = arith.constant 0 : index
    %4 = vector.load %arg4[%c0_5, %c0_6] : memref<4x4xf32, #tpu.memory_space<vmem>>, vector<4x4xf32>
    %cst = arith.constant dense<0.000000e+00> : vector<4x256xf32>
    %5 = tpu.matmul %4, %1, %cst {dimension_numbers = #tpu.dot_dimension_numbers<[1], [0], [0], [1], [0, 0, 1, 1], [], []>} : vector<4x4xf32>, vector<4x256xf32>, vector<4x256xf32> -> vector<4x256xf32>
    %6 = vector.broadcast %3 : vector<4x1xf32> to vector<4x256xf32>
    %7 = arith.addf %5, %6 : vector<4x256xf32>
    %cst_7 = arith.constant 0.000000e+00 : f32
    %8 = vector.broadcast %cst_7 : f32 to vector<4x256xf32>
    %9 = arith.maximumf %7, %8 : vector<4x256xf32>
    %c0_8 = arith.constant 0 : index
    %c0_9 = arith.constant 0 : index
    %10 = vector.load %arg5[%c0_8, %c0_9] : memref<4x4xf32, #tpu.memory_space<vmem>>, vector<4x4xf32>
    %cst_10 = arith.constant dense<0.000000e+00> : vector<4x256xf32>
    %11 = tpu.matmul %10, %9, %cst_10 {dimension_numbers = #tpu.dot_dimension_numbers<[1], [0], [0], [1], [0, 0, 1, 1], [], []>} : vector<4x4xf32>, vector<4x256xf32>, vector<4x256xf32> -> vector<4x256xf32>
    %c0_11 = arith.constant 0 : index
    %c0_12 = arith.constant 0 : index
    %12 = vector.load %arg6[%c0_11, %c0_12] : memref<4x1xf32, #tpu.memory_space<vmem>>, vector<4x1xf32>
    %13 = vector.broadcast %12 : vector<4x1xf32> to vector<4x256xf32>
    %14 = arith.addf %11, %13 : vector<4x256xf32>
    %cst_13 = arith.constant 0.000000e+00 : f32
    %15 = vector.broadcast %cst_13 : f32 to vector<4x256xf32>
    %16 = arith.maximumf %14, %15 : vector<4x256xf32>
    %c0_14 = arith.constant 0 : index
    %c0_15 = arith.constant 0 : index
    %17 = vector.load %arg7[%c0_14, %c0_15] : memref<5x4xf32, #tpu.memory_space<vmem>>, vector<5x4xf32>
    %cst_16 = arith.constant dense<0.000000e+00> : vector<5x256xf32>
    %18 = tpu.matmul %17, %16, %cst_16 {dimension_numbers = #tpu.dot_dimension_numbers<[1], [0], [0], [1], [0, 0, 1, 1], [], []>} : vector<5x4xf32>, vector<4x256xf32>, vector<5x256xf32> -> vector<5x256xf32>
    %c0_17 = arith.constant 0 : index
    %c0_18 = arith.constant 0 : index
    %19 = vector.load %arg8[%c0_17, %c0_18] : memref<5x1xf32, #tpu.memory_space<vmem>>, vector<5x1xf32>
    %20 = vector.broadcast %19 : vector<5x1xf32> to vector<5x256xf32>
    %21 = arith.addf %18, %20 : vector<5x256xf32>
    %c0_19 = arith.constant 0 : index
    %c0_20 = arith.constant 0 : index
    %c0_21 = arith.constant 0 : index
    %22 = vector.load %arg9[%c0_19, %c0_20, %c0_21] : memref<1x5x256xf32, #tpu.memory_space<vmem>>, vector<1x5x256xf32>
    %23 = vector.shape_cast %22 : vector<1x5x256xf32> to vector<5x256xf32>
    %24 = vector.shape_cast %21 : vector<5x256xf32> to vector<1x5x256xf32>
    tpu.vector_store %arg9[%c0_19, %c0_20, %c0_21], %24 {strides = array<i32>} : memref<1x5x256xf32, #tpu.memory_space<vmem>>, vector<1x5x256xf32>,
    return
  }
  func.func @transform_0(%arg0: i32, %arg1: i32) -> (i32, i32, i32) {
    %c0_i32 = arith.constant 0 : i32
    %c0_i32_0 = arith.constant 0 : i32
    return %arg0, %c0_i32, %arg1 : i32, i32, i32
  }
  func.func @transform_1(%arg0: i32, %arg1: i32) -> (i32, i32, i32) {
    %c0_i32 = arith.constant 0 : i32
    %c0_i32_0 = arith.constant 0 : i32
    %c0_i32_1 = arith.constant 0 : i32
    return %arg0, %c0_i32, %c0_i32_0 : i32, i32, i32
  }
  func.func @transform_2(%arg0: i32, %arg1: i32) -> (i32, i32) {
    %c0_i32 = arith.constant 0 : i32
    %c0_i32_0 = arith.constant 0 : i32
    %c0_i32_1 = arith.constant 0 : i32
    return %c0_i32, %c0_i32_0 : i32, i32
  }
  func.func @transform_3(%arg0: i32, %arg1: i32) -> (i32, i32) {
    %c0_i32 = arith.constant 0 : i32
    %c0_i32_0 = arith.constant 0 : i32
    %c0_i32_1 = arith.constant 0 : i32
    return %c0_i32, %c0_i32_0 : i32, i32
  }
  func.func @transform_4(%arg0: i32, %arg1: i32) -> (i32, i32) {
    %c0_i32 = arith.constant 0 : i32
    %c0_i32_0 = arith.constant 0 : i32
    %c0_i32_1 = arith.constant 0 : i32
    return %c0_i32, %c0_i32_0 : i32, i32
  }
  func.func @transform_5(%arg0: i32, %arg1: i32) -> (i32, i32) {
    %c0_i32 = arith.constant 0 : i32
    %c0_i32_0 = arith.constant 0 : i32
    %c0_i32_1 = arith.constant 0 : i32
    return %c0_i32, %c0_i32_0 : i32, i32
  }
  func.func @transform_6(%arg0: i32, %arg1: i32) -> (i32, i32) {
    %c0_i32 = arith.constant 0 : i32
    %c0_i32_0 = arith.constant 0 : i32
    %c0_i32_1 = arith.constant 0 : i32
    return %c0_i32, %c0_i32_0 : i32, i32
  }
  func.func @transform_7(%arg0: i32, %arg1: i32) -> (i32, i32, i32) {
    %c0_i32 = arith.constant 0 : i32
    %c0_i32_0 = arith.constant 0 : i32
    return %arg0, %c0_i32, %arg1 : i32, i32, i32
  }
}

</mosaic_0001>

<llo_original>
// kernel: f_combined_forward.1
$region0: #{f_combined_forward.1}
  #allocation0 [shape = 'u32[]', space=smem, size = 0x4, offset = 0x4, fixed_abs, tag = 'smem constant byte address 0x4 - core index']
  #allocation1 [shape = 'u32[144,128]{1,0:T(1,128)}', space=vmem, size = 0x12000, scoped, tag = 'internal scratch']
  %s0 = inlined_call_operand.vmem [shape: f32[2,4,256], index: 0, kind: input, shape index: {}]
  %s1 = inlined_call_operand.vmem [shape: f32[2,4,1], index: 1, kind: input, shape index: {}]
  %s2 = inlined_call_operand.vmem [shape: f32[4,4], index: 2, kind: input, shape index: {}]
  %s3 = inlined_call_operand.vmem [shape: f32[4,4], index: 3, kind: input, shape index: {}]
  %s4 = inlined_call_operand.vmem [shape: f32[4,1], index: 4, kind: input, shape index: {}]
  %s5 = inlined_call_operand.vmem [shape: f32[5,4], index: 5, kind: input, shape index: {}]
  %s6 = inlined_call_operand.vmem [shape: f32[5,1], index: 6, kind: input, shape index: {}]
  %s7 = inlined_call_operand.vmem [shape: f32[2,5,256], index: 7, kind: output, shape index: {}]
  %s8 = sld [smem:[#allocation0]]
  $region61: #{f_combined_forward.1} parent=0
    _
  %s10 = ssub.s32 1, %s8
  %s11 = scalar_select 0, %s10, %s8
  loop: start=0, step=1, limit=4
  $region2: #{f_combined_forward.1} parent=0 // loop_pre_header
    _
  $region3: #{f_combined_forward.1} parent=0 // loop_header
    %s13 = sphi 0, %s17
    %p14 = scmp.ge.s32.totalorder %s13, 4
    %s20 = sphi 0, %s32
    %s21 = sphi 0, %s28
    %s22 = sphi 0, %s20
    %s23 = sphi 0, %s21
    %s24 = sphi 0, %s22
    %s25 = sphi 0, %s23
    %s37 = sphi 0, %s39
    %s40 = sphi 0, %s37
    %s41 = sphi 0, %s40
    %s57 = sphi 0, %s41
    %s63 = sphi 0, %s65
    %s66 = sphi 0, %s63
    %s67 = sphi 0, %s66
    %s83 = sphi 0, %s67
    %s87 = sphi 0, %s87
    %s89 = sphi 0, %s87
    %s90 = sphi 0, %s89
    %s104 = sphi 0, %s90
    %s108 = sphi 0, %s108
    %s110 = sphi 0, %s108
    %s111 = sphi 0, %s110
    %s125 = sphi 0, %s111
    %s129 = sphi 0, %s129
    %s131 = sphi 0, %s129
    %s132 = sphi 0, %s131
    %s146 = sphi 0, %s132
    %s150 = sphi 0, %s150
    %s152 = sphi 0, %s150
    %s153 = sphi 0, %s152
    %s167 = sphi 0, %s153
    %s171 = sphi 0, %s171
    %s173 = sphi 0, %s171
    %s174 = sphi 0, %s173
    %s188 = sphi 0, %s174
    %s196 = sphi 0, %s198
    %s199 = sphi 0, %s196
    %s200 = sphi 0, %s199
    %s216 = sphi 0, %s200
  $region4: #{f_combined_forward.1} parent=0 // loop_header_branch
    %16 = sbr.rel (%p14) target = $region8
  $region5: #{f_combined_forward.1} parent=0 // loop_body
    %s18 = ssub.s32 %s13, 1
    %s19 = ssub.s32 %s13, 2
    %s26 = sadd.s32 1, %s21
    %p27 = scmp.ge.s32.totalorder %s26, 1
    %s28 = scalar_select %p27, 0, %s26
    %s29 = sadd.s32 1, %s20
    %s30 = scalar_select %p27, %s29, %s20
    %p31 = scmp.ge.s32.totalorder %s30, 2
    %s32 = scalar_select %p31, 0, %s30
    %s33 = ssub.s32 %s20, %s32
    %s34 = ssub.s32 %s21, %s28
    %s35 = sor.u32 %s33, %s34
    %p36 = scmp.eq.s32.totalorder %s35, 0
    %s38 = sadd.s32 %s37, 1
    %s39 = scalar_select %p36, %s37, %s38
    %p42 = pneg %p36
    %p43 = scmp.eq.s32.totalorder %s13, 1
    %p44 = por %p42, %p43
    %p45 = scmp.ne.s32.totalorder %s37, %s40
    %p46 = scmp.eq.s32.totalorder %s13, 0
    %p47 = por %p45, %p46
    %p48 = scmp.ne.s32.totalorder %s37, %s40
    %p49 = scmp.eq.s32.totalorder %s18, 1
    %p50 = por %p48, %p49
    %p51 = scmp.ne.s32.totalorder %s40, %s41
    %p52 = scmp.eq.s32.totalorder %s18, 0
    %p53 = por %p51, %p52
    %p54 = scmp.ne.s32.totalorder %s40, %s41
    %p55 = scmp.eq.s32.totalorder %s19, 1
    %p56 = por %p54, %p55
    %p58 = scmp.ne.s32.totalorder %s41, %s57
    %p59 = scmp.eq.s32.totalorder %s19, 0
    %p60 = por %p58, %p59
    %s61 = ssub.s32 %s20, %s32
    %p62 = scmp.eq.s32.totalorder %s61, 0
    %s64 = sadd.s32 %s63, 1
    %s65 = scalar_select %p62, %s63, %s64
    %p68 = pneg %p62
    %p69 = scmp.eq.s32.totalorder %s13, 1
    %p70 = por %p68, %p69
    %p71 = scmp.ne.s32.totalorder %s63, %s66
    %p72 = scmp.eq.s32.totalorder %s13, 0
    %p73 = por %p71, %p72
    %p74 = scmp.ne.s32.totalorder %s63, %s66
    %p75 = scmp.eq.s32.totalorder %s18, 1
    %p76 = por %p74, %p75
    %p77 = scmp.ne.s32.totalorder %s66, %s67
    %p78 = scmp.eq.s32.totalorder %s18, 0
    %p79 = por %p77, %p78
    %p80 = scmp.ne.s32.totalorder %s66, %s67
    %p81 = scmp.eq.s32.totalorder %s19, 1
    %p82 = por %p80, %p81
    %p84 = scmp.ne.s32.totalorder %s67, %s83
    %p85 = scmp.eq.s32.totalorder %s19, 0
    %p86 = por %p84, %p85
    %s88 = sadd.s32 %s87, 1
    %p91 = scmp.eq.s32.totalorder %s13, 1
    %p92 = scmp.ne.s32.totalorder %s87, %s89
    %p93 = scmp.eq.s32.totalorder %s13, 0
    %p94 = por %p92, %p93
    %p95 = scmp.ne.s32.totalorder %s87, %s89
    %p96 = scmp.eq.s32.totalorder %s18, 1
    %p97 = por %p95, %p96
    %p98 = scmp.ne.s32.totalorder %s89, %s90
    %p99 = scmp.eq.s32.totalorder %s18, 0
    %p100 = por %p98, %p99
    %p101 = scmp.ne.s32.totalorder %s89, %s90
    %p102 = scmp.eq.s32.totalorder %s19, 1
    %p103 = por %p101, %p102
    %p105 = scmp.ne.s32.totalorder %s90, %s104
    %p106 = scmp.eq.s32.totalorder %s19, 0
    %p107 = por %p105, %p106
    %s109 = sadd.s32 %s108, 1
    %p112 = scmp.eq.s32.totalorder %s13, 1
    %p113 = scmp.ne.s32.totalorder %s108, %s110
    %p114 = scmp.eq.s32.totalorder %s13, 0
    %p115 = por %p113, %p114
    %p116 = scmp.ne.s32.totalorder %s108, %s110
    %p117 = scmp.eq.s32.totalorder %s18, 1
    %p118 = por %p116, %p117
    %p119 = scmp.ne.s32.totalorder %s110, %s111
    %p120 = scmp.eq.s32.totalorder %s18, 0
    %p121 = por %p119, %p120
    %p122 = scmp.ne.s32.totalorder %s110, %s111
    %p123 = scmp.eq.s32.totalorder %s19, 1
    %p124 = por %p122, %p123
    %p126 = scmp.ne.s32.totalorder %s111, %s125
    %p127 = scmp.eq.s32.totalorder %s19, 0
    %p128 = por %p126, %p127
    %s130 = sadd.s32 %s129, 1
    %p133 = scmp.eq.s32.totalorder %s13, 1
    %p134 = scmp.ne.s32.totalorder %s129, %s131
    %p135 = scmp.eq.s32.totalorder %s13, 0
    %p136 = por %p134, %p135
    %p137 = scmp.ne.s32.totalorder %s129, %s131
    %p138 = scmp.eq.s32.totalorder %s18, 1
    %p139 = por %p137, %p138
    %p140 = scmp.ne.s32.totalorder %s131, %s132
    %p141 = scmp.eq.s32.totalorder %s18, 0
    %p142 = por %p140, %p141
    %p143 = scmp.ne.s32.totalorder %s131, %s132
    %p144 = scmp.eq.s32.totalorder %s19, 1
    %p145 = por %p143, %p144
    %p147 = scmp.ne.s32.totalorder %s132, %s146
    %p148 = scmp.eq.s32.totalorder %s19, 0
    %p149 = por %p147, %p148
    %s151 = sadd.s32 %s150, 1
    %p154 = scmp.eq.s32.totalorder %s13, 1
    %p155 = scmp.ne.s32.totalorder %s150, %s152
    %p156 = scmp.eq.s32.totalorder %s13, 0
    %p157 = por %p155, %p156
    %p158 = scmp.ne.s32.totalorder %s150, %s152
    %p159 = scmp.eq.s32.totalorder %s18, 1
    %p160 = por %p158, %p159
    %p161 = scmp.ne.s32.totalorder %s152, %s153
    %p162 = scmp.eq.s32.totalorder %s18, 0
    %p163 = por %p161, %p162
    %p164 = scmp.ne.s32.totalorder %s152, %s153
    %p165 = scmp.eq.s32.totalorder %s19, 1
    %p166 = por %p164, %p165
    %p168 = scmp.ne.s32.totalorder %s153, %s167
    %p169 = scmp.eq.s32.totalorder %s19, 0
    %p170 = por %p168, %p169
    %s172 = sadd.s32 %s171, 1
    %p175 = scmp.eq.s32.totalorder %s13, 1
    %p176 = scmp.ne.s32.totalorder %s171, %s173
    %p177 = scmp.eq.s32.totalorder %s13, 0
    %p178 = por %p176, %p177
    %p179 = scmp.ne.s32.totalorder %s171, %s173
    %p180 = scmp.eq.s32.totalorder %s18, 1
    %p181 = por %p179, %p180
    %p182 = scmp.ne.s32.totalorder %s173, %s174
    %p183 = scmp.eq.s32.totalorder %s18, 0
    %p184 = por %p182, %p183
    %p185 = scmp.ne.s32.totalorder %s173, %s174
    %p186 = scmp.eq.s32.totalorder %s19, 1
    %p187 = por %p185, %p186
    %p189 = scmp.ne.s32.totalorder %s174, %s188
    %p190 = scmp.eq.s32.totalorder %s19, 0
    %p191 = por %p189, %p190
    %s192 = ssub.s32 %s20, %s32
    %s193 = ssub.s32 %s21, %s28
    %s194 = sor.u32 %s192, %s193
    %p195 = scmp.eq.s32.totalorder %s194, 0
    %s197 = sadd.s32 %s196, 1
    %s198 = scalar_select %p195, %s196, %s197
    %p201 = pneg %p195
    %p202 = scmp.eq.s32.totalorder %s13, 1
    %p203 = por %p201, %p202
    %p204 = scmp.ne.s32.totalorder %s196, %s199
    %p205 = scmp.eq.s32.totalorder %s13, 0
    %p206 = por %p204, %p205
    %p207 = scmp.ne.s32.totalorder %s196, %s199
    %p208 = scmp.eq.s32.totalorder %s18, 1
    %p209 = por %p207, %p208
    %p210 = scmp.ne.s32.totalorder %s199, %s200
    %p211 = scmp.eq.s32.totalorder %s18, 0
    %p212 = por %p210, %p211
    %p213 = scmp.ne.s32.totalorder %s199, %s200
    %p214 = scmp.eq.s32.totalorder %s19, 1
    %p215 = por %p213, %p214
    %p217 = scmp.ne.s32.totalorder %s200, %s216
    %p218 = scmp.eq.s32.totalorder %s19, 0
    %p219 = por %p217, %p218
    %p220 = scmp.le.s32.totalorder 1, %s13
    %p221 = scmp.lt.s32.totalorder %s13, 3
    %p222 = pnand %p220, %p221
    %p223 = pneg %p222
    // Predicated region
    $region9: #{f_combined_forward.1} parent=5 // pred_check
      _
    $region10: #{f_combined_forward.1} parent=5 // pred_check_branch
      %225 = sbr.rel (%p222) target = $region12
    $region11: #{f_combined_forward.1} parent=5 // pred_region
      %s226 = ssub.s32 %s13, 1
      // Predicated region
      $region13: #{f_combined_forward.1} parent=11 // pred_check
        %p227 = pneg %p100
      $region14: #{f_combined_forward.1} parent=11 // pred_check_branch
        %229 = sbr.rel (%p227) target = $region16
      $region15: #{f_combined_forward.1} parent=11 // pred_region
        _
      $region16: #{f_combined_forward.1} parent=11 // pred_fallthru
        _
      // Predicated region
      $region17: #{f_combined_forward.1} parent=11 // pred_check
        %p230 = pneg %p121
      $region18: #{f_combined_forward.1} parent=11 // pred_check_branch
        %232 = sbr.rel (%p230) target = $region20
      $region19: #{f_combined_forward.1} parent=11 // pred_region
        _
      $region20: #{f_combined_forward.1} parent=11 // pred_fallthru
        _
      // Predicated region
      $region21: #{f_combined_forward.1} parent=11 // pred_check
        %p233 = pneg %p142
      $region22: #{f_combined_forward.1} parent=11 // pred_check_branch
        %235 = sbr.rel (%p233) target = $region24
      $region23: #{f_combined_forward.1} parent=11 // pred_region
        _
      $region24: #{f_combined_forward.1} parent=11 // pred_fallthru
        _
      // Predicated region
      $region25: #{f_combined_forward.1} parent=11 // pred_check
        %p236 = pneg %p163
      $region26: #{f_combined_forward.1} parent=11 // pred_check_branch
        %238 = sbr.rel (%p236) target = $region28
      $region27: #{f_combined_forward.1} parent=11 // pred_region
        _
      $region28: #{f_combined_forward.1} parent=11 // pred_fallthru
        _
      // Predicated region
      $region29: #{f_combined_forward.1} parent=11 // pred_check
        %p239 = pneg %p184
      $region30: #{f_combined_forward.1} parent=11 // pred_check_branch
        %241 = sbr.rel (%p239) target = $region32
      $region31: #{f_combined_forward.1} parent=11 // pred_region
        _
      $region32: #{f_combined_forward.1} parent=11 // pred_fallthru
        _
    $region12: #{f_combined_forward.1} parent=5 // pred_fallthru
      _
    %p242 = scmp.lt.s32.totalorder %s13, 2
    // Predicated region
    $region33: #{f_combined_forward.1} parent=5 // pred_check
      %p243 = pneg %p242
    $region34: #{f_combined_forward.1} parent=5 // pred_check_branch
      %245 = sbr.rel (%p243) target = $region36
    $region35: #{f_combined_forward.1} parent=5 // pred_region
      // Predicated region
      $region37: #{f_combined_forward.1} parent=35 // pred_check
        %p246 = pneg %p47
      $region38: #{f_combined_forward.1} parent=35 // pred_check_branch
        %248 = sbr.rel (%p246) target = $region40
      $region39: #{f_combined_forward.1} parent=35 // pred_region
        %s249 = smul.u32 2, %s21
        %p250 = scmp.lt.s32.totalorder %s20, 1
        %s251 = scalar_select %p250, %s20, 1
        %p252 = scmp.lt.s32.totalorder %s249, 1
        %s253 = scalar_select %p252, %s249, 1
        %s254 = smul.addr %s251, 2
        %s255 = sadd.s32 %s253, %s254
        %s256 = smul.addr %s255, 4
        %s257 = scalar_lea.vmem %s0, %s256
        %s258 = smul.u32 2, %s21
      $region40: #{f_combined_forward.1} parent=35 // pred_fallthru
        _
      // Predicated region
      $region41: #{f_combined_forward.1} parent=35 // pred_check
        %p259 = pneg %p73
      $region42: #{f_combined_forward.1} parent=35 // pred_check_branch
        %261 = sbr.rel (%p259) target = $region44
      $region43: #{f_combined_forward.1} parent=35 // pred_region
        %p262 = scmp.lt.s32.totalorder %s20, 1
        %s263 = scalar_select %p262, %s20, 1
        %s264 = smul.addr %s263, 4
        %s265 = scalar_lea.vmem %s1, %s264
      $region44: #{f_combined_forward.1} parent=35 // pred_fallthru
        _
    $region36: #{f_combined_forward.1} parent=5 // pred_fallthru
      _
    %p266 = scmp.le.s32.totalorder 1, %s13
    %p267 = scmp.lt.s32.totalorder %s13, 3
    %p268 = pnand %p266, %p267
    %p269 = pneg %p268
    // Predicated region
    $region45: #{f_combined_forward.1} parent=5 // pred_check
      _
    $region46: #{f_combined_forward.1} parent=5 // pred_check_branch
      %271 = sbr.rel (%p268) target = $region48
    $region47: #{f_combined_forward.1} parent=5 // pred_region
      %s272 = ssub.s32 %s13, 1
      %s273 = smul.u32 2, %s23
      %p274 = scmp.lt.s32.totalorder %s22, 1
      %s275 = scalar_select %p274, %s22, 1
      %p276 = scmp.lt.s32.totalorder %s273, 1
      %s277 = scalar_select %p276, %s273, 1
      %s278 = smul.addr %s275, 2
      %s279 = sadd.s32 %s277, %s278
      %s280 = smul.addr %s279, 4
      %s281 = scalar_lea.vmem %s0, %s280
      %p282 = pneg %p53
      %p283 = pneg %p50
      %p284 = scmp.lt.s32.totalorder %s22, 1
      %s285 = scalar_select %p284, %s22, 1
      %s286 = smul.addr %s285, 4
      %s287 = scalar_lea.vmem %s1, %s286
      %p288 = pneg %p79
      %p289 = pneg %p76
      %p290 = pneg %p100
      %p291 = pneg %p97
      %p292 = pneg %p121
      %p293 = pneg %p118
      %p294 = pneg %p142
      %p295 = pneg %p139
      %p296 = pneg %p163
      %p297 = pneg %p160
      %p298 = pneg %p184
      %p299 = pneg %p181
      %p300 = pneg %p212
      %p301 = pneg %p209
      %s302 = smul.u32 2, %s23
      %p303 = scmp.lt.s32.totalorder %s22, 1
      %s304 = scalar_select %p303, %s22, 1
      %p305 = scmp.lt.s32.totalorder %s302, 1
      %s306 = scalar_select %p305, %s302, 1
      %s307 = smul.addr %s304, 2
      %s308 = sadd.s32 %s306, %s307
      %s309 = smul.addr %s308, 8
      %s310 = scalar_lea.vmem %s7, %s309
      %s311 = smul.u32 2, %s23
      %p312 = scmp.lt.s32.totalorder %s22, 1
      %s313 = scalar_select %p312, %s22, 1
      %p314 = scmp.lt.s32.totalorder %s311, 1
      %s315 = scalar_select %p314, %s311, 1
      %s316 = smul.addr %s313, 2
      %s317 = sadd.s32 %s315, %s316
      %s318 = smul.addr %s317, 4
      %s319 = scalar_lea.vmem %s0, %s318
      %s320 = smul.u32 2, %s23
      %p321 = scmp.lt.s32.totalorder %s22, 1
      %s322 = scalar_select %p321, %s22, 1
      %s323 = smul.addr %s322, 4
      %s324 = scalar_lea.vmem %s1, %s323
      %s325 = smul.u32 2, %s23
      %p326 = scmp.lt.s32.totalorder %s22, 1
      %s327 = scalar_select %p326, %s22, 1
      %p328 = scmp.lt.s32.totalorder %s325, 1
      %s329 = scalar_select %p328, %s325, 1
      %s330 = smul.addr %s327, 2
      %s331 = sadd.s32 %s329, %s330
      %s332 = smul.addr %s331, 8
      %s333 = scalar_lea.vmem %s7, %s332
      %s334 = smul.u32 2, %s23
      %v335 = vld [vmem:[%s319] sm:$0xff]
      %v336 = vld [vmem:[%s324] sm:$0xf]
      %v337 = vld [vmem:[%s2] sm:$0xf]
      %339 = vset.pattern.permute.xlu0 0
      %340 = vperm.xlu0 %339, %v336
      %v341 = vpop.permute.xlu0 %340
      %v344 = vcombine.high %v335, %v335
      %vm345 = vcmask 31744
      %v347 = vsel %vm345, %v337, 0
      %vm349 = vcmask 1043456
      %v350 = vsel %vm349, %v335, 0
      %v352 = vsel %vm349, %v344, 0
      %354 = vmatprep.subr.mxu0 0.0
      %355 = vmatpush1.msra.mxu0 0.0
      %356 = vmatprep.subr.mxu0 0.0
      %357 = vmatpush1.msra.mxu0 0.0
      %358 = vmatprep.subr.mxu0 0.0
      %359 = vmatpush1.msra.mxu0 0.0
      %360 = vmatprep.subr.mxu0 0.0
      %361 = vmatpush1.msra.mxu0 0.0
      %362 = vmatprep.subr.mxu0 0.0
      %363 = vmatpush1.msra.mxu0 0.0
      %364 = vmatprep.subr.mxu0 0.0
      %365 = vmatpush1.msra.mxu0 0.0
      %366 = vmatprep.subr.mxu0 0.0
      %367 = vmatpush1.msra.mxu0 0.0
      %368 = vmatprep.subr.mxu0 0.0
      %369 = vmatpush1.msra.mxu0 0.0
      %370 = vmatprep.subr.mxu0 0.0
      %371 = vmatpush1.msra.mxu0 0.0
      %372 = vmatprep.subr.mxu0 0.0
      %373 = vmatpush1.msra.mxu0 0.0
      %374 = vmatprep.subr.mxu0 0.0
      %375 = vmatpush1.msra.mxu0 0.0
      %376 = vmatprep.subr.mxu0 0.0
      %377 = vmatpush1.msra.mxu0 0.0
      %378 = vmatprep.subr.mxu0 0.0
      %379 = vmatpush1.msra.mxu0 0.0
      %380 = vmatprep.subr.mxu0 0.0
      %381 = vmatpush1.msra.mxu0 0.0
      %382 = vmatprep.subr.mxu0 0.0
      %383 = vmatpush1.msra.mxu0 0.0
      %384 = vmatprep.subr.mxu0 %v352
      %385 = vmatpush1.msra.mxu0 %v350
      %386 = vmatprep.subr.mxu0 0.0
      %387 = vmatpush2.msra.mxu0 0.0
      %388 = vmatprep.subr.mxu0 0.0
      %389 = vmatpush2.msra.mxu0 0.0
      %390 = vmatprep.subr.mxu0 0.0
      %391 = vmatpush2.msra.mxu0 0.0
      %392 = vmatprep.subr.mxu0 0.0
      %393 = vmatpush2.msra.mxu0 0.0
      %394 = vmatprep.subr.mxu0 0.0
      %395 = vmatpush2.msra.mxu0 0.0
      %396 = vmatprep.subr.mxu0 0.0
      %397 = vmatpush2.msra.mxu0 0.0
      %398 = vmatprep.subr.mxu0 0.0
      %399 = vmatpush2.msra.mxu0 0.0
      %400 = vmatprep.subr.mxu0 0.0
      %401 = vmatpush2.msra.mxu0 0.0
      %402 = vmatprep.subr.mxu0 0.0
      %403 = vmatpush2.msra.mxu0 0.0
      %404 = vmatprep.subr.mxu0 0.0
      %405 = vmatpush2.msra.mxu0 0.0
      %406 = vmatprep.subr.mxu0 0.0
      %407 = vmatpush2.msra.mxu0 0.0
      %408 = vmatprep.subr.mxu0 0.0
      %409 = vmatpush2.msra.mxu0 0.0
      %410 = vmatprep.subr.mxu0 0.0
      %411 = vmatpush2.msra.mxu0 0.0
      %412 = vmatprep.subr.mxu0 0.0
      %413 = vmatpush2.msra.mxu0 0.0
      %414 = vmatprep.subr.mxu0 0.0
      %415 = vmatpush2.msra.mxu0 0.0
      %416 = vmatprep.subr.mxu0 0.0
      %417 = vmatpush2.msra.mxu0 0.0
      %418 = vmatprep.mubr.f32.mxu0 0.0
      %419 = vmatmul.mubr.f32.gmra.mxu0 %v347
      %v420 = vpop.f32.mrf.mxu0
      %v421 = vadd.f32 %v341, %v420
      %v422 = vpop.f32.mrf.mxu0
      %v423 = vadd.f32 %v341, %v422
      %424 = vdwg.mxu0
      %v425 = vmax.f32 %v421, 0.0
      %v426 = vmax.f32 %v423, 0.0
      %v427 = vld [vmem:[%s3] sm:$0xf]
      %v428 = vld [vmem:[%s4] sm:$0xf]
      %430 = vset.pattern.permute.xlu0 0
      %431 = vperm.xlu0 %430, %v428
      %v432 = vpop.permute.xlu0 %431
      %v435 = vsel %vm345, %v427, 0
      %v438 = vsel %vm349, %v425, 0
      %v441 = vsel %vm349, %v426, 0
      %443 = vmatprep.subr.mxu0 0.0
      %444 = vmatpush1.msra.mxu0 0.0
      %445 = vmatprep.subr.mxu0 0.0
      %446 = vmatpush1.msra.mxu0 0.0
      %447 = vmatprep.subr.mxu0 0.0
      %448 = vmatpush1.msra.mxu0 0.0
      %449 = vmatprep.subr.mxu0 0.0
      %450 = vmatpush1.msra.mxu0 0.0
      %451 = vmatprep.subr.mxu0 0.0
      %452 = vmatpush1.msra.mxu0 0.0
      %453 = vmatprep.subr.mxu0 0.0
      %454 = vmatpush1.msra.mxu0 0.0
      %455 = vmatprep.subr.mxu0 0.0
      %456 = vmatpush1.msra.mxu0 0.0
      %457 = vmatprep.subr.mxu0 0.0
      %458 = vmatpush1.msra.mxu0 0.0
      %459 = vmatprep.subr.mxu0 0.0
      %460 = vmatpush1.msra.mxu0 0.0
      %461 = vmatprep.subr.mxu0 0.0
      %462 = vmatpush1.msra.mxu0 0.0
      %463 = vmatprep.subr.mxu0 0.0
      %464 = vmatpush1.msra.mxu0 0.0
      %465 = vmatprep.subr.mxu0 0.0
      %466 = vmatpush1.msra.mxu0 0.0
      %467 = vmatprep.subr.mxu0 0.0
      %468 = vmatpush1.msra.mxu0 0.0
      %469 = vmatprep.subr.mxu0 0.0
      %470 = vmatpush1.msra.mxu0 0.0
      %471 = vmatprep.subr.mxu0 0.0
      %472 = vmatpush1.msra.mxu0 0.0
      %473 = vmatprep.subr.mxu0 %v441
      %474 = vmatpush1.msra.mxu0 %v438
      %475 = vmatprep.subr.mxu0 0.0
      %476 = vmatpush2.msra.mxu0 0.0
      %477 = vmatprep.subr.mxu0 0.0
      %478 = vmatpush2.msra.mxu0 0.0
      %479 = vmatprep.subr.mxu0 0.0
      %480 = vmatpush2.msra.mxu0 0.0
      %481 = vmatprep.subr.mxu0 0.0
      %482 = vmatpush2.msra.mxu0 0.0
      %483 = vmatprep.subr.mxu0 0.0
      %484 = vmatpush2.msra.mxu0 0.0
      %485 = vmatprep.subr.mxu0 0.0
      %486 = vmatpush2.msra.mxu0 0.0
      %487 = vmatprep.subr.mxu0 0.0
      %488 = vmatpush2.msra.mxu0 0.0
      %489 = vmatprep.subr.mxu0 0.0
      %490 = vmatpush2.msra.mxu0 0.0
      %491 = vmatprep.subr.mxu0 0.0
      %492 = vmatpush2.msra.mxu0 0.0
      %493 = vmatprep.subr.mxu0 0.0
      %494 = vmatpush2.msra.mxu0 0.0
      %495 = vmatprep.subr.mxu0 0.0
      %496 = vmatpush2.msra.mxu0 0.0
      %497 = vmatprep.subr.mxu0 0.0
      %498 = vmatpush2.msra.mxu0 0.0
      %499 = vmatprep.subr.mxu0 0.0
      %500 = vmatpush2.msra.mxu0 0.0
      %501 = vmatprep.subr.mxu0 0.0
      %502 = vmatpush2.msra.mxu0 0.0
      %503 = vmatprep.subr.mxu0 0.0
      %504 = vmatpush2.msra.mxu0 0.0
      %505 = vmatprep.subr.mxu0 0.0
      %506 = vmatpush2.msra.mxu0 0.0
      %507 = vmatprep.mubr.f32.mxu0 0.0
      %508 = vmatmul.mubr.f32.gmra.mxu0 %v435
      %v509 = vpop.f32.mrf.mxu0
      %v510 = vadd.f32 %v432, %v509
      %v511 = vpop.f32.mrf.mxu0
      %v512 = vadd.f32 %v432, %v511
      %513 = vdwg.mxu0
      %v514 = vmax.f32 %v510, 0.0
      %v515 = vmax.f32 %v512, 0.0
      %v516 = vld [vmem:[%s5] sm:$0x1f]
      %v517 = vld [vmem:[%s6] sm:$0x1f]
      %519 = vset.pattern.permute.xlu0 0
      %520 = vperm.xlu0 %519, %v517
      %v521 = vpop.permute.xlu0 %520
      %v524 = vsel %vm345, %v516, 0
      %v527 = vsel %vm349, %v514, 0
      %v530 = vsel %vm349, %v515, 0
      %532 = vmatprep.subr.mxu0 0.0
      %533 = vmatpush1.msra.mxu0 0.0
      %534 = vmatprep.subr.mxu0 0.0
      %535 = vmatpush1.msra.mxu0 0.0
      %536 = vmatprep.subr.mxu0 0.0
      %537 = vmatpush1.msra.mxu0 0.0
      %538 = vmatprep.subr.mxu0 0.0
      %539 = vmatpush1.msra.mxu0 0.0
      %540 = vmatprep.subr.mxu0 0.0
      %541 = vmatpush1.msra.mxu0 0.0
      %542 = vmatprep.subr.mxu0 0.0
      %543 = vmatpush1.msra.mxu0 0.0
      %544 = vmatprep.subr.mxu0 0.0
      %545 = vmatpush1.msra.mxu0 0.0
      %546 = vmatprep.subr.mxu0 0.0
      %547 = vmatpush1.msra.mxu0 0.0
      %548 = vmatprep.subr.mxu0 0.0
      %549 = vmatpush1.msra.mxu0 0.0
      %550 = vmatprep.subr.mxu0 0.0
      %551 = vmatpush1.msra.mxu0 0.0
      %552 = vmatprep.subr.mxu0 0.0
      %553 = vmatpush1.msra.mxu0 0.0
      %554 = vmatprep.subr.mxu0 0.0
      %555 = vmatpush1.msra.mxu0 0.0
      %556 = vmatprep.subr.mxu0 0.0
      %557 = vmatpush1.msra.mxu0 0.0
      %558 = vmatprep.subr.mxu0 0.0
      %559 = vmatpush1.msra.mxu0 0.0
      %560 = vmatprep.subr.mxu0 0.0
      %561 = vmatpush1.msra.mxu0 0.0
      %562 = vmatprep.subr.mxu0 %v530
      %563 = vmatpush1.msra.mxu0 %v527
      %564 = vmatprep.subr.mxu0 0.0
      %565 = vmatpush2.msra.mxu0 0.0
      %566 = vmatprep.subr.mxu0 0.0
      %567 = vmatpush2.msra.mxu0 0.0
      %568 = vmatprep.subr.mxu0 0.0
      %569 = vmatpush2.msra.mxu0 0.0
      %570 = vmatprep.subr.mxu0 0.0
      %571 = vmatpush2.msra.mxu0 0.0
      %572 = vmatprep.subr.mxu0 0.0
      %573 = vmatpush2.msra.mxu0 0.0
      %574 = vmatprep.subr.mxu0 0.0
      %575 = vmatpush2.msra.mxu0 0.0
      %576 = vmatprep.subr.mxu0 0.0
      %577 = vmatpush2.msra.mxu0 0.0
      %578 = vmatprep.subr.mxu0 0.0
      %579 = vmatpush2.msra.mxu0 0.0
      %580 = vmatprep.subr.mxu0 0.0
      %581 = vmatpush2.msra.mxu0 0.0
      %582 = vmatprep.subr.mxu0 0.0
      %583 = vmatpush2.msra.mxu0 0.0
      %584 = vmatprep.subr.mxu0 0.0
      %585 = vmatpush2.msra.mxu0 0.0
      %586 = vmatprep.subr.mxu0 0.0
      %587 = vmatpush2.msra.mxu0 0.0
      %588 = vmatprep.subr.mxu0 0.0
      %589 = vmatpush2.msra.mxu0 0.0
      %590 = vmatprep.subr.mxu0 0.0
      %591 = vmatpush2.msra.mxu0 0.0
      %592 = vmatprep.subr.mxu0 0.0
      %593 = vmatpush2.msra.mxu0 0.0
      %594 = vmatprep.subr.mxu0 0.0
      %595 = vmatpush2.msra.mxu0 0.0
      %596 = vmatprep.mubr.f32.mxu0 0.0
      %597 = vmatmul.mubr.f32.gmra.mxu0 %v524
      %v598 = vpop.f32.mrf.mxu0
      %v599 = vadd.f32 %v521, %v598
      %v600 = vpop.f32.mrf.mxu0
      %v601 = vadd.f32 %v521, %v600
      %602 = vdwg.mxu0
      %603 = vst [vmem:[%s333] sm:$0x1f] %v599
      %604 = vst [vmem:[%s333 + $0x8] sm:$0x1f] %v601
      %s605 = smul.u32 2, %s23
      %p606 = scmp.lt.s32.totalorder %s22, 1
      %s607 = scalar_select %p606, %s22, 1
      %p608 = scmp.lt.s32.totalorder %s605, 1
      %s609 = scalar_select %p608, %s605, 1
      %s610 = smul.addr %s607, 2
      %s611 = sadd.s32 %s609, %s610
      %s612 = smul.addr %s611, 8
      %s613 = scalar_lea.vmem %s7, %s612
      // Predicated region
      $region49: #{f_combined_forward.1} parent=47 // pred_check
        %p614 = pneg %p209
      $region50: #{f_combined_forward.1} parent=47 // pred_check_branch
        %616 = sbr.rel (%p614) target = $region52
      $region51: #{f_combined_forward.1} parent=47 // pred_region
        %s617 = smul.u32 2, %s23
      $region52: #{f_combined_forward.1} parent=47 // pred_fallthru
        _
    $region48: #{f_combined_forward.1} parent=5 // pred_fallthru
      _
    %p618 = scmp.le.s32.totalorder 2, %s13
    // Predicated region
    $region53: #{f_combined_forward.1} parent=5 // pred_check
      %p619 = pneg %p618
    $region54: #{f_combined_forward.1} parent=5 // pred_check_branch
      %621 = sbr.rel (%p619) target = $region56
    $region55: #{f_combined_forward.1} parent=5 // pred_region
      %s622 = ssub.s32 %s13, 2
      // Predicated region
      $region57: #{f_combined_forward.1} parent=55 // pred_check
        %p623 = pneg %p215
      $region58: #{f_combined_forward.1} parent=55 // pred_check_branch
        %625 = sbr.rel (%p623) target = $region60
      $region59: #{f_combined_forward.1} parent=55 // pred_region
        %s626 = smul.u32 2, %s25
        %p627 = scmp.lt.s32.totalorder %s24, 1
        %s628 = scalar_select %p627, %s24, 1
        %p629 = scmp.lt.s32.totalorder %s626, 1
        %s630 = scalar_select %p629, %s626, 1
        %s631 = smul.addr %s628, 2
        %s632 = sadd.s32 %s630, %s631
        %s633 = smul.addr %s632, 8
        %s634 = scalar_lea.vmem %s7, %s633
      $region60: #{f_combined_forward.1} parent=55 // pred_fallthru
        _
    $region56: #{f_combined_forward.1} parent=5 // pred_fallthru
      _
  $region6: #{f_combined_forward.1} parent=0 // loop_footer
    %s17 = sadd.s32 1, %s13
  $region7: #{f_combined_forward.1} parent=0 // loop_footer_branch
    %12 = sbr.rel target = $region3
  $region8: #{f_combined_forward.1} parent=0 // loop_exit
    _

</llo_original>
